<compile_context>
chip_gen: v7x
topology: tpu7x:2x2x1
jax: 0.10.0
libtpu: 0.0.40
codegen_flags: <defaults>
</compile_context>

<pallas_src>
import functools
import math

import jax
import jax.numpy as jnp
from jax.experimental import pallas as pl
from jax.experimental.pallas import tpu as pltpu


def _normalize_w_kernel(w_ref, out_ref):
    # w_ref: (D, TC) tile of W^T; normalize each column (each class vector).
    w = w_ref[...].astype(jnp.float32)
    ss = jnp.sum(w * w, axis=0, keepdims=True)                 # (1, TC)
    inv = jax.lax.rsqrt(jnp.maximum(ss, 1e-24))                # == 1/max(||w||,1e-12)
    out_ref[...] = (w * inv).astype(out_ref.dtype)


def _aam_softmax_kernel(label_ref, x_ref, w_ref,               # inputs
                        loss_ref, correct_ref,                 # outputs
                        xn_ref, m_ref, l_ref, tl_ref, mc_ref, am_ref,  # scratch
                        *, n_classes, tile_c, scale, cos_m, sin_m, th, mm,
                        easy_margin):
    c = pl.program_id(1)
    nc = pl.num_programs(1)

    @pl.when(c == 0)
    def _init():
        # Normalize this batch tile once, keep it resident across all C tiles.
        x = x_ref[...].astype(jnp.float32)                     # (TB, D)
        ss = jnp.sum(x * x, axis=1, keepdims=True)
        inv = jax.lax.rsqrt(jnp.maximum(ss, 1e-24))
        xn_ref[...] = (x * inv).astype(xn_ref.dtype)
        m_ref[...] = jnp.full_like(m_ref, -1e30)               # running max
        l_ref[...] = jnp.zeros_like(l_ref)                     # running sum
        tl_ref[...] = jnp.zeros_like(tl_ref)                   # true scaled logit
        mc_ref[...] = jnp.full_like(mc_ref, -2.0)              # running max cosine
        am_ref[...] = jnp.zeros_like(am_ref)                   # running argmax

    lab = label_ref[...]                                       # (TB, 1) int32

    # Cosine similarities on the MXU (f32 accumulation).
    cos = jnp.dot(xn_ref[...], w_ref[...],
                  preferred_element_type=jnp.float32)          # (TB, TC)

    col = jax.lax.broadcasted_iota(jnp.int32, cos.shape, 1) + c * tile_c
    valid = col < n_classes
    is_true = col == lab                                       # (TB, TC)

    # ArcFace margin — only the label column changes, so compute phi on a
    # (TB, 1) column instead of the full tile (no materialized one-hot).
    cos_true = jnp.sum(jnp.where(is_true, cos, 0.0), axis=1, keepdims=True)
    sin_true = jnp.sqrt(jnp.clip(1.0 - cos_true * cos_true, 0.0, 1.0))
    phi = cos_true * cos_m - sin_true * sin_m
    if easy_margin:
        phi = jnp.where(cos_true > 0.0, phi, cos_true)
    else:
        phi = jnp.where(cos_true - th > 0.0, phi, cos_true - mm)
    delta = phi - cos_true                                     # (TB, 1)

    logits = scale * (cos + jnp.where(is_true, delta, 0.0))
    logits = jnp.where(valid, logits, -1e30)                   # mask padded cols

    lab_in_tile = jnp.logical_and(lab >= c * tile_c, lab < (c + 1) * tile_c)
    tl_ref[...] = tl_ref[...] + jnp.where(lab_in_tile, scale * phi, 0.0)

    # Online logsumexp over the C tiles.
    t_max = jnp.max(logits, axis=1, keepdims=True)             # (TB, 1)
    m_new = jnp.maximum(m_ref[...], t_max)
    alpha = jnp.exp(m_ref[...] - m_new)
    l_ref[...] = alpha * l_ref[...] + jnp.sum(jnp.exp(logits - m_new),
                                              axis=1, keepdims=True)
    m_ref[...] = m_new

    # Fused running top-1 on the un-margined cosine (first-index tie-break).
    cos_acc = jnp.where(valid, cos, -2.0)
    t_cmax = jnp.max(cos_acc, axis=1, keepdims=True)
    cand = jnp.where(cos_acc == t_cmax, col, jnp.int32(n_classes))
    t_arg = jnp.min(cand, axis=1, keepdims=True)
    better = t_cmax > mc_ref[...]
    am_ref[...] = jnp.where(better, t_arg, am_ref[...])
    mc_ref[...] = jnp.where(better, t_cmax, mc_ref[...])

    @pl.when(c == nc - 1)
    def _finalize():
        loss_ref[...] = (m_ref[...] + jnp.log(l_ref[...])) - tl_ref[...]
        correct_ref[...] = (am_ref[...] == lab).astype(jnp.float32)


def aam_softmax_loss(x, W, labels, *, margin=0.3, scale=15.0,
                     easy_margin=False, tile_b=128, tile_c=512):
    """x: (B, D), W: (C, D) [PyTorch layout], labels: (B,). Returns (loss, prec1)."""
    B, D = x.shape
    C, D2 = W.shape
    assert D2 == D and labels.shape[0] == B

    cos_m = math.cos(margin)
    sin_m = math.sin(margin)
    th = math.cos(math.pi - margin)
    mm = math.sin(math.pi - margin) * margin

    def round_up(a, b):
        return (a + b - 1) // b * b

    TB = min(tile_b, round_up(B, 8))
    B_pad = round_up(B, TB)
    TC = min(tile_c, round_up(C, 128))
    C_pad = round_up(C, TC)
    nb, nc = B_pad // TB, C_pad // TC

    x_p = jnp.pad(x, ((0, B_pad - B), (0, 0)))
    lab_p = jnp.pad(labels.reshape(B, 1).astype(jnp.int32),
                    ((0, B_pad - B), (0, 0)))
    wt = jnp.pad(W.T, ((0, 0), (0, C_pad - C)))                # (D, C_pad)

    # Kernel 1: normalize W once (amortized over all batch tiles).
    wn = pl.pallas_call(
        _normalize_w_kernel,
        out_shape=jax.ShapeDtypeStruct((D, C_pad), W.dtype),
        grid=(nc,),
        in_specs=[pl.BlockSpec((D, TC), lambda c: (0, c))],
        out_specs=pl.BlockSpec((D, TC), lambda c: (0, c)),
        compiler_params=pltpu.CompilerParams(
            dimension_semantics=("parallel",)),
    )(wt)

    kernel = functools.partial(
        _aam_softmax_kernel, n_classes=C, tile_c=TC, scale=float(scale),
        cos_m=cos_m, sin_m=sin_m, th=th, mm=mm,
        easy_margin=bool(easy_margin))

    cost = pl.CostEstimate(
        flops=int(2 * B_pad * D * C_pad),
        transcendentals=int(B_pad * C_pad),
        bytes_accessed=int(x_p.size * x_p.dtype.itemsize
                           + nb * wn.size * wn.dtype.itemsize
                           + 3 * B_pad * 4))

    per_loss, correct = pl.pallas_call(
        kernel,
        out_shape=(jax.ShapeDtypeStruct((B_pad, 1), jnp.float32),
                   jax.ShapeDtypeStruct((B_pad, 1), jnp.float32)),
        grid=(nb, nc),
        in_specs=[
            pl.BlockSpec((TB, 1), lambda b, c: (b, 0)),   # labels
            pl.BlockSpec((TB, D), lambda b, c: (b, 0)),   # x
            pl.BlockSpec((D, TC), lambda b, c: (0, c)),   # normalized W^T
        ],
        out_specs=(
            pl.BlockSpec((TB, 1), lambda b, c: (b, 0)),   # per-example loss
            pl.BlockSpec((TB, 1), lambda b, c: (b, 0)),   # per-example correct
        ),
        scratch_shapes=[
            pltpu.VMEM((TB, D), x.dtype),        # normalized x tile
            pltpu.VMEM((TB, 1), jnp.float32),    # running max (logsumexp)
            pltpu.VMEM((TB, 1), jnp.float32),    # running sum (logsumexp)
            pltpu.VMEM((TB, 1), jnp.float32),    # true scaled logit
            pltpu.VMEM((TB, 1), jnp.float32),    # running max cosine
            pltpu.VMEM((TB, 1), jnp.int32),      # running argmax
        ],
        compiler_params=pltpu.CompilerParams(
            dimension_semantics=("parallel", "arbitrary"),
            vmem_limit_bytes=32 * 1024 * 1024),
        cost_estimate=cost,
    )(lab_p, x_p, wn)

    # TODO(synk): final O(B) mean stays in XLA so the batch grid axis can be
    # megacore-parallel (per-core scratch cannot hold one shared scalar).
    loss = jnp.sum(per_loss[:B, 0]) / B
    prec1 = 100.0 * jnp.sum(correct[:B, 0]) / B
    return loss, prec1


if __name__ == "__main__":
    B, nOut, nClasses = 16, 128, 300
    margin, scale = 0.3, 15.0

    key = jax.random.PRNGKey(0)
    kx, kw, kl = jax.random.split(key, 3)

    x = jax.random.normal(kx, (B, nOut), dtype=jnp.float32)
    w_std = math.sqrt(2.0 / (nOut + nClasses))       # xavier_normal, gain=1
    W = w_std * jax.random.normal(kw, (nClasses, nOut), dtype=jnp.float32)
    labels = jax.random.randint(kl, (B,), 0, nClasses, dtype=jnp.int32)

    # Small tiles to exercise multi-tile B, multi-tile C and C masking.
    loss, prec1 = aam_softmax_loss(x, W, labels, margin=margin, scale=scale,
                                   tile_b=8, tile_c=128)
    jax.block_until_ready((loss, prec1))

    # Pure-JAX ArcFace reference.
    cos_m, sin_m = math.cos(margin), math.sin(margin)
    th = math.cos(math.pi - margin)
    mm = math.sin(math.pi - margin) * margin
    xn = x / jnp.maximum(jnp.linalg.norm(x, axis=1, keepdims=True), 1e-12)
    wn = W / jnp.maximum(jnp.linalg.norm(W, axis=1, keepdims=True), 1e-12)
    cosine = xn @ wn.T
    sine = jnp.sqrt(jnp.clip(1.0 - cosine * cosine, 0.0, 1.0))
    phi = cosine * cos_m - sine * sin_m
    phi = jnp.where(cosine - th > 0, phi, cosine - mm)
    one_hot = jax.nn.one_hot(labels, nClasses, dtype=jnp.float32)
    output = scale * (one_hot * phi + (1.0 - one_hot) * cosine)
    ref_loss = jnp.mean(jax.nn.logsumexp(output, axis=1)
                        - jnp.sum(output * one_hot, axis=1))
    ref_prec = 100.0 * jnp.mean(
        (jnp.argmax(cosine, axis=1) == labels).astype(jnp.float32))

    assert jnp.allclose(loss, ref_loss, atol=2e-3, rtol=1e-4), (loss, ref_loss)
    assert jnp.allclose(prec1, ref_prec, atol=1e-3), (prec1, ref_prec)

    print("KERNEL_OK")
</pallas_src>

<mosaic_0001>
module attributes {stable_mosaic.version = 11 : i64} {
  func.func @_normalize_w_kernel(%arg0: i32, %arg1: memref<128x128xf32, #tpu.memory_space<vmem>>, %arg2: memref<128x128xf32, #tpu.memory_space<vmem>>) attributes {dimension_semantics = [#tpu.dimension_semantics<parallel>], iteration_bounds = array<i64: 3>, scalar_prefetch = 0 : i64, scratch_operands = 0 : i64, tpu.core_type = #tpu.core_type<tc>, window_params = [{transform_indices = @transform_0, window_bounds = array<i64: 128, 128>}, {transform_indices = @transform_1, window_bounds = array<i64: 128, 128>}]} {
    %c0 = arith.constant 0 : index
    %c0_0 = arith.constant 0 : index
    %0 = vector.load %arg1[%c0, %c0_0] : memref<128x128xf32, #tpu.memory_space<vmem>>, vector<128x128xf32>
    %1 = arith.mulf %0, %0 : vector<128x128xf32>
    %cst = arith.constant dense<0.000000e+00> : vector<128xf32>
    %2 = vector.multi_reduction <add>, %1, %cst [0] : vector<128x128xf32> to vector<128xf32>
    %3 = vector.shape_cast %2 : vector<128xf32> to vector<1x128xf32>
    %cst_1 = arith.constant 1.000000e-24 : f32
    %4 = vector.broadcast %cst_1 : f32 to vector<1x128xf32>
    %5 = arith.maximumf %3, %4 : vector<1x128xf32>
    %6 = math.rsqrt %5 : vector<1x128xf32>
    %7 = vector.broadcast %6 : vector<1x128xf32> to vector<128x128xf32>
    %8 = arith.mulf %0, %7 : vector<128x128xf32>
    %c0_2 = arith.constant 0 : index
    %c0_3 = arith.constant 0 : index
    %9 = vector.load %arg2[%c0_2, %c0_3] : memref<128x128xf32, #tpu.memory_space<vmem>>, vector<128x128xf32>
    tpu.vector_store %arg2[%c0_2, %c0_3], %8 {strides = array<i32>} : memref<128x128xf32, #tpu.memory_space<vmem>>, vector<128x128xf32>,
    return
  }
  func.func @transform_0(%arg0: i32) -> (i32, i32) {
    %c0_i32 = arith.constant 0 : i32
    %c0_i32_0 = arith.constant 0 : i32
    return %c0_i32, %arg0 : i32, i32
  }
  func.func @transform_1(%arg0: i32) -> (i32, i32) {
    %c0_i32 = arith.constant 0 : i32
    %c0_i32_0 = arith.constant 0 : i32
    return %c0_i32, %arg0 : i32, i32
  }
}

</mosaic_0001>

<llo_original>
// kernel: tpu_custom_call.1
$region0: #{tpu_custom_call.1}
  #allocation0 [shape = 'u32[]', space=smem, size = 0x4, offset = 0x4, fixed_abs, tag = 'smem constant byte address 0x4 - core index']
  #allocation1 [shape = 'u32[144,128]{1,0:T(1,128)}', space=vmem, size = 0x12000, scoped, tag = 'internal scratch']
  %s0 = inlined_call_operand.hbm [shape: f32[128,384], index: 0, kind: input, shape index: {}]
  %s1 = inlined_call_operand.hbm [shape: f32[128,384], index: 1, kind: output, shape index: {}]
  %s2 = sld [smem:[#allocation0]]
  $region41: #{tpu_custom_call.1} parent=0
    _
  %s4 = ssub.s32 1, %s2
  %s5 = scalar_select 0, %s4, %s2
  $region1: #{tpu_custom_call.1} parent=0
    #allocation2 [shape = 'u8[131072]{0}', space=vmem, size = 0x20000, scoped, tag = 'input window, operand 0']
    #allocation3 [shape = 's32[2]{0}', space=sflag, size = 0x8, scoped, tag = 'scoped memory for tpu_custom_call.1']
    #allocation4 [shape = 's32[2]{0}', space=sflag, size = 0x8, scoped, tag = 'scoped memory for tpu_custom_call.1']
    #allocation5 [shape = 'u8[131072]{0}', space=vmem, size = 0x20000, scoped, tag = 'output window, operand 0']
    %6 = vsyncpa [#allocation3], 0
    %s7 = scalar_lea.sflag [#allocation3], 1
    %8 = vsyncpa %s7, 0
    %9 = vsyncpa [#allocation4], 0
    %s10 = scalar_lea.sflag [#allocation4], 1
    %11 = vsyncpa %s10, 0
    loop: start=0, step=1, limit=5
    $region2: #{tpu_custom_call.1} parent=1 // loop_pre_header
      _
    $region3: #{tpu_custom_call.1} parent=1 // loop_header
      %s13 = sphi 0, %s17
      %p14 = scmp.ge.s32.totalorder %s13, 5
      %s23 = sphi 0, %s25
      %s26 = sphi 0, %s23
      %s27 = sphi 0, %s26
      %s43 = sphi 0, %s27
      %s49 = sphi 0, %s51
      %s52 = sphi 0, %s49
      %s53 = sphi 0, %s52
      %s69 = sphi 0, %s53
    $region4: #{tpu_custom_call.1} parent=1 // loop_header_branch
      %16 = sbr.rel (%p14) target = $region8
    $region5: #{tpu_custom_call.1} parent=1 // loop_body
      %s18 = ssub.s32 %s13, 1
      %s19 = ssub.s32 %s13, 2
      %s20 = sadd.s32 %s13, 1
      %s21 = ssub.s32 %s13, %s20
      %p22 = scmp.eq.s32.totalorder %s21, 0
      %s24 = sadd.s32 %s23, 1
      %s25 = scalar_select %p22, %s23, %s24
      %p28 = pneg %p22
      %p29 = scmp.eq.s32.totalorder %s13, 2
      %p30 = por %p28, %p29
      %p31 = scmp.ne.s32.totalorder %s23, %s26
      %p32 = scmp.eq.s32.totalorder %s13, 0
      %p33 = por %p31, %p32
      %p34 = scmp.ne.s32.totalorder %s23, %s26
      %p35 = scmp.eq.s32.totalorder %s18, 2
      %p36 = por %p34, %p35
      %p37 = scmp.ne.s32.totalorder %s26, %s27
      %p38 = scmp.eq.s32.totalorder %s18, 0
      %p39 = por %p37, %p38
      %p40 = scmp.ne.s32.totalorder %s26, %s27
      %p41 = scmp.eq.s32.totalorder %s19, 2
      %p42 = por %p40, %p41
      %p44 = scmp.ne.s32.totalorder %s27, %s43
      %p45 = scmp.eq.s32.totalorder %s19, 0
      %p46 = por %p44, %p45
      %s47 = ssub.s32 %s13, %s20
      %p48 = scmp.eq.s32.totalorder %s47, 0
      %s50 = sadd.s32 %s49, 1
      %s51 = scalar_select %p48, %s49, %s50
      %p54 = pneg %p48
      %p55 = scmp.eq.s32.totalorder %s13, 2
      %p56 = por %p54, %p55
      %p57 = scmp.ne.s32.totalorder %s49, %s52
      %p58 = scmp.eq.s32.totalorder %s13, 0
      %p59 = por %p57, %p58
      %p60 = scmp.ne.s32.totalorder %s49, %s52
      %p61 = scmp.eq.s32.totalorder %s18, 2
      %p62 = por %p60, %p61
      %p63 = scmp.ne.s32.totalorder %s52, %s53
      %p64 = scmp.eq.s32.totalorder %s18, 0
      %p65 = por %p63, %p64
      %p66 = scmp.ne.s32.totalorder %s52, %s53
      %p67 = scmp.eq.s32.totalorder %s19, 2
      %p68 = por %p66, %p67
      %p70 = scmp.ne.s32.totalorder %s53, %s69
      %p71 = scmp.eq.s32.totalorder %s19, 0
      %p72 = por %p70, %p71
      %p73 = scmp.le.s32.totalorder 1, %s13
      %p74 = scmp.lt.s32.totalorder %s13, 4
      %p75 = pnand %p73, %p74
      %p76 = pneg %p75
      // Predicated region
      $region9: #{tpu_custom_call.1} parent=5 // pred_check
        _
      $region10: #{tpu_custom_call.1} parent=5 // pred_check_branch
        %78 = sbr.rel (%p75) target = $region12
      $region11: #{tpu_custom_call.1} parent=5 // pred_region
        %s79 = ssub.s32 %s13, 1
      $region12: #{tpu_custom_call.1} parent=5 // pred_fallthru
        _
      %p80 = scmp.lt.s32.totalorder %s13, 3
      // Predicated region
      $region13: #{tpu_custom_call.1} parent=5 // pred_check
        %p81 = pneg %p80
      $region14: #{tpu_custom_call.1} parent=5 // pred_check_branch
        %83 = sbr.rel (%p81) target = $region16
      $region15: #{tpu_custom_call.1} parent=5 // pred_region
        // Predicated region
        $region17: #{tpu_custom_call.1} parent=15 // pred_check
          %p84 = pneg %p33
        $region18: #{tpu_custom_call.1} parent=15 // pred_check_branch
          %86 = sbr.rel (%p84) target = $region20
        $region19: #{tpu_custom_call.1} parent=15 // pred_region
          %s87 = sand.u32 %s23, 1
          %s88 = scalar_lea.sflag [#allocation3], %s87
          %s89 = sand.u32 %s23, 1
          %s90 = smul.addr %s89, 128
          %s91 = scalar_lea.vmem [#allocation2], %s90
          %s93 = ssub.s32 2048, 2048
          %94 = vsyncadd %s88, %s93
          %s95 = smul.addr %s13, 128
          %s96 = scalar_lea.hbm %s0, %s95
          %s97 = sshll.u32 %s91, 4
          %s98 = int_to_ptr.vmem [resolvable:$true] %s97
          %103 = dma.hbm_to_vmem [thread:$0]  %s96, 2048, %s98, %s88, 384, 128, 8
        $region20: #{tpu_custom_call.1} parent=15 // pred_fallthru
          _
      $region16: #{tpu_custom_call.1} parent=5 // pred_fallthru
        _
      %p104 = scmp.le.s32.totalorder 1, %s13
      %p105 = scmp.lt.s32.totalorder %s13, 4
      %p106 = pnand %p104, %p105
      %p107 = pneg %p106
      // Predicated region
      $region21: #{tpu_custom_call.1} parent=5 // pred_check
        _
      $region22: #{tpu_custom_call.1} parent=5 // pred_check_branch
        %109 = sbr.rel (%p106) target = $region24
      $region23: #{tpu_custom_call.1} parent=5 // pred_region
        %s110 = ssub.s32 %s13, 1
        %s111 = sand.u32 %s26, 1
        %s112 = scalar_lea.sflag [#allocation3], %s111
        %s113 = sand.u32 %s26, 1
        %s114 = smul.addr %s113, 128
        %s115 = scalar_lea.vmem [#allocation2], %s114
        // Predicated region
        $region25: #{tpu_custom_call.1} parent=23 // pred_check
          %p116 = pneg %p39
        $region26: #{tpu_custom_call.1} parent=23 // pred_check_branch
          %118 = sbr.rel (%p116) target = $region28
        $region27: #{tpu_custom_call.1} parent=23 // pred_region
          %119 = dma.done %s112, 2048
        $region28: #{tpu_custom_call.1} parent=23 // pred_fallthru
          _
        %s120 = sand.u32 %s26, 1
        %s121 = scalar_lea.sflag [#allocation3], %s120
        %s122 = sand.u32 %s26, 1
        %s123 = smul.addr %s122, 128
        %s124 = scalar_lea.vmem [#allocation2], %s123
        %p125 = pneg %p39
        %p126 = pneg %p36
        %p127 = pneg %p65
        %p128 = pneg %p62
        %s129 = sand.u32 %s52, 1
        %s130 = scalar_lea.sflag [#allocation4], %s129
        %s131 = sand.u32 %s52, 1
        %s132 = smul.addr %s131, 128
        %s133 = scalar_lea.vmem [#allocation5], %s132
        %v134 = vld [vmem:[%s115] sm:$0xff]
        %v135 = vld [vmem:[%s115 + $0x8] sm:$0xff]
        %v136 = vld [vmem:[%s115 + $0x10] sm:$0xff]
        %v137 = vld [vmem:[%s115 + $0x18] sm:$0xff]
        %v138 = vld [vmem:[%s115 + $0x20] sm:$0xff]
        %v139 = vld [vmem:[%s115 + $0x28] sm:$0xff]
        %v140 = vld [vmem:[%s115 + $0x30] sm:$0xff]
        %v141 = vld [vmem:[%s115 + $0x38] sm:$0xff]
        %v142 = vld [vmem:[%s115 + $0x40] sm:$0xff]
        %v143 = vld [vmem:[%s115 + $0x48] sm:$0xff]
        %v144 = vld [vmem:[%s115 + $0x50] sm:$0xff]
        %v145 = vld [vmem:[%s115 + $0x58] sm:$0xff]
        %v146 = vld [vmem:[%s115 + $0x60] sm:$0xff]
        %v147 = vld [vmem:[%s115 + $0x68] sm:$0xff]
        %v148 = vld [vmem:[%s115 + $0x70] sm:$0xff]
        %v149 = vld [vmem:[%s115 + $0x78] sm:$0xff]
        %v150 = vmul.f32 %v134, %v134
        %v151 = vmul.f32 %v135, %v135
        %v152 = vmul.f32 %v136, %v136
        %v153 = vmul.f32 %v137, %v137
        %v154 = vmul.f32 %v138, %v138
        %v155 = vmul.f32 %v139, %v139
        %v156 = vmul.f32 %v140, %v140
        %v157 = vmul.f32 %v141, %v141
        %v158 = vmul.f32 %v142, %v142
        %v159 = vmul.f32 %v143, %v143
        %v160 = vmul.f32 %v144, %v144
        %v161 = vmul.f32 %v145, %v145
        %v162 = vmul.f32 %v146, %v146
        %v163 = vmul.f32 %v147, %v147
        %v164 = vmul.f32 %v148, %v148
        %v165 = vmul.f32 %v149, %v149
        %v166 = vadd.f32 %v150, %v151
        %v167 = vadd.f32 %v166, %v152
        %v168 = vadd.f32 %v167, %v153
        %v169 = vadd.f32 %v168, %v154
        %v170 = vadd.f32 %v169, %v155
        %v171 = vadd.f32 %v170, %v156
        %v172 = vadd.f32 %v171, %v157
        %v173 = vadd.f32 %v172, %v158
        %v174 = vadd.f32 %v173, %v159
        %v175 = vadd.f32 %v174, %v160
        %v176 = vadd.f32 %v175, %v161
        %v177 = vadd.f32 %v176, %v162
        %v178 = vadd.f32 %v177, %v163
        %v179 = vadd.f32 %v178, %v164
        %v180 = vadd.f32 %v179, %v165
        %v181 = vrot.slane %v180, 4
        %v182 = vadd.f32 %v180, %v181
        %v183 = vrot.slane %v182, 2
        %v184 = vadd.f32 %v182, %v183
        %v185 = vrot.slane %v184, 1
        %v186 = vadd.f32 %v184, %v185
        %v187 = vmax.f32 %v186, 1e-24
        %v188 = vrsqrt.pop %v187
        %v189 = vmul.f32 %v134, %v188
        %v190 = vmul.f32 %v135, %v188
        %v191 = vmul.f32 %v136, %v188
        %v192 = vmul.f32 %v137, %v188
        %v193 = vmul.f32 %v138, %v188
        %v194 = vmul.f32 %v139, %v188
        %v195 = vmul.f32 %v140, %v188
        %v196 = vmul.f32 %v141, %v188
        %v197 = vmul.f32 %v142, %v188
        %v198 = vmul.f32 %v143, %v188
        %v199 = vmul.f32 %v144, %v188
        %v200 = vmul.f32 %v145, %v188
        %v201 = vmul.f32 %v146, %v188
        %v202 = vmul.f32 %v147, %v188
        %v203 = vmul.f32 %v148, %v188
        %v204 = vmul.f32 %v149, %v188
        %205 = vst [vmem:[%s133] sm:$0xff] %v189
        %206 = vst [vmem:[%s133 + $0x8] sm:$0xff] %v190
        %207 = vst [vmem:[%s133 + $0x10] sm:$0xff] %v191
        %208 = vst [vmem:[%s133 + $0x18] sm:$0xff] %v192
        %209 = vst [vmem:[%s133 + $0x20] sm:$0xff] %v193
        %210 = vst [vmem:[%s133 + $0x28] sm:$0xff] %v194
        %211 = vst [vmem:[%s133 + $0x30] sm:$0xff] %v195
        %212 = vst [vmem:[%s133 + $0x38] sm:$0xff] %v196
        %213 = vst [vmem:[%s133 + $0x40] sm:$0xff] %v197
        %214 = vst [vmem:[%s133 + $0x48] sm:$0xff] %v198
        %215 = vst [vmem:[%s133 + $0x50] sm:$0xff] %v199
        %216 = vst [vmem:[%s133 + $0x58] sm:$0xff] %v200
        %217 = vst [vmem:[%s133 + $0x60] sm:$0xff] %v201
        %218 = vst [vmem:[%s133 + $0x68] sm:$0xff] %v202
        %219 = vst [vmem:[%s133 + $0x70] sm:$0xff] %v203
        %220 = vst [vmem:[%s133 + $0x78] sm:$0xff] %v204
        %s221 = sand.u32 %s52, 1
        %s222 = scalar_lea.sflag [#allocation4], %s221
        %s223 = sand.u32 %s52, 1
        %s224 = smul.addr %s223, 128
        %s225 = scalar_lea.vmem [#allocation5], %s224
        // Predicated region
        $region29: #{tpu_custom_call.1} parent=23 // pred_check
          %p226 = pneg %p62
        $region30: #{tpu_custom_call.1} parent=23 // pred_check_branch
          %228 = sbr.rel (%p226) target = $region32
        $region31: #{tpu_custom_call.1} parent=23 // pred_region
          %s230 = ssub.s32 2048, 2048
          %231 = vsyncadd %s222, %s230
          %s232 = smul.addr %s18, 128
          %s233 = scalar_lea.hbm %s1, %s232
          %s234 = sshll.u32 %s225, 4
          %s235 = int_to_ptr.vmem [resolvable:$true] %s234
          %240 = dma.vmem_to_hbm [thread:$0]  %s235, 2048, %s233, %s222, 128, 384, 8
        $region32: #{tpu_custom_call.1} parent=23 // pred_fallthru
          _
      $region24: #{tpu_custom_call.1} parent=5 // pred_fallthru
        _
      %p241 = scmp.le.s32.totalorder 2, %s13
      // Predicated region
      $region33: #{tpu_custom_call.1} parent=5 // pred_check
        %p242 = pneg %p241
      $region34: #{tpu_custom_call.1} parent=5 // pred_check_branch
        %244 = sbr.rel (%p242) target = $region36
      $region35: #{tpu_custom_call.1} parent=5 // pred_region
        %s245 = ssub.s32 %s13, 2
        // Predicated region
        $region37: #{tpu_custom_call.1} parent=35 // pred_check
          %p246 = pneg %p68
        $region38: #{tpu_custom_call.1} parent=35 // pred_check_branch
          %248 = sbr.rel (%p246) target = $region40
        $region39: #{tpu_custom_call.1} parent=35 // pred_region
          %s249 = sand.u32 %s53, 1
          %s250 = scalar_lea.sflag [#allocation4], %s249
          %s251 = sand.u32 %s53, 1
          %s252 = smul.addr %s251, 128
          %s253 = scalar_lea.vmem [#allocation5], %s252
          %254 = dma.done %s250, 2048
        $region40: #{tpu_custom_call.1} parent=35 // pred_fallthru
          _
      $region36: #{tpu_custom_call.1} parent=5 // pred_fallthru
        _
    $region6: #{tpu_custom_call.1} parent=1 // loop_footer
      %s17 = sadd.s32 1, %s13
    $region7: #{tpu_custom_call.1} parent=1 // loop_footer_branch
      %12 = sbr.rel target = $region3
    $region8: #{tpu_custom_call.1} parent=1 // loop_exit
      _
    %255 = vsyncpa [#allocation3], 1
    %s256 = scalar_lea.sflag [#allocation3], 1
    %257 = vsyncpa %s256, 1
    %258 = vsyncpa [#allocation4], 1
    %s259 = scalar_lea.sflag [#allocation4], 1
    %260 = vsyncpa %s259, 1

</llo_original>
